<compile_context>
chip_gen: v7x
topology: tpu7x:2x2x1
jax: 0.10.0
libtpu: 0.0.40
codegen_flags: <defaults>
</compile_context>

<pallas_src>
import numpy as np
import jax
import jax.numpy as jnp
from jax.experimental import pallas as pl
from jax.experimental.pallas import tpu as pltpu

_SUBLANE = 8                         # f32 sublane height
_MAX_BLOCK_BYTES = 2 * 1024 * 1024   # per-array block cap (2x-buffered x+out ~ 8 MiB worst case)


def _normalize_kernel(x_ref, mean_ref, inv_std_ref, o_ref):
    # x_ref: (TB, F); mean/inv_std: (1, F) broadcast across sublanes.
    # Pure VPU sub + mul — the divide was hoisted to the wrapper as 1/std.
    o_ref[...] = (x_ref[...] - mean_ref[...]) * inv_std_ref[...]


def normalization_forward(x, mean, std, NNz):
    """JAX/Pallas equivalent of Normalization.forward.

    x    : (..., F) float32
    mean : (D,)     float32   (full statistics vector, as passed to __init__)
    std  : (D,)     float32
    NNz  : bool
        NNz=True  -> F must equal D - 2
        NNz=False -> F must equal D
    """
    x = jnp.asarray(x, jnp.float32)
    mean = jnp.asarray(mean, jnp.float32)
    std = jnp.asarray(std, jnp.float32)

    # Build the effective per-feature statistics (cheap glue, done in JAX).
    if NNz:
        mean_eff = mean[2:]
        std_eff = std[2:]
    else:
        mean_eff = jnp.concatenate([jnp.zeros((2,), jnp.float32), mean[2:]], axis=0)
        std_eff = jnp.concatenate([jnp.ones((2,), jnp.float32), std[2:]], axis=0)

    orig_shape = x.shape
    F = int(orig_shape[-1])
    assert mean_eff.shape[0] == F, "feature dim mismatch with mean/std"

    # Flatten leading dims into a single batch axis (matches torch broadcasting).
    x2d = x.reshape(-1, F)
    B = x2d.shape[0]

    mean_2d = mean_eff.reshape(1, F)
    inv_std_2d = (1.0 / std_eff).reshape(1, F)   # exact reciprocal (1 ulp vs divide)

    # --- batch tile: biggest multiple of 8 under the per-block byte budget ---
    rows_cap = max(_SUBLANE, (_MAX_BLOCK_BYTES // (F * 4)) // _SUBLANE * _SUBLANE)
    if B <= rows_cap:
        TB = B            # single block == full array dims -> no masking at all
    else:
        TB = rows_cap     # multiple of 8; ragged last block handled by Pallas

    grid = (pl.cdiv(B, TB),)

    out = pl.pallas_call(
        _normalize_kernel,
        out_shape=jax.ShapeDtypeStruct((B, F), jnp.float32),
        grid=grid,
        in_specs=[
            pl.BlockSpec((TB, F), lambda i: (i, 0)),   # x tile (pipelined over batch)
            pl.BlockSpec((1, F), lambda i: (0, 0)),    # mean (resident)
            pl.BlockSpec((1, F), lambda i: (0, 0)),    # 1/std (resident)
        ],
        out_specs=pl.BlockSpec((TB, F), lambda i: (i, 0)),
        compiler_params=pltpu.CompilerParams(
            dimension_semantics=("parallel",),  # lets v7x's 2 TCs split the batch axis
        ),
    )(x2d, mean_2d, inv_std_2d)

    return out.reshape(orig_shape)


if __name__ == "__main__":
    key = jax.random.PRNGKey(0)
    kx, km, ks, kx2, kx3 = jax.random.split(key, 5)

    D = 34   # length of the full mean/std statistics vectors
    B = 8    # batch

    mean = jax.random.normal(km, (D,), dtype=jnp.float32)
    std = jax.random.uniform(ks, (D,), dtype=jnp.float32, minval=0.5, maxval=2.0)

    # Case 1: NNz=True  -> input features = D - 2 = 32
    x1 = jax.random.normal(kx, (B, D - 2), dtype=jnp.float32)
    out1 = jax.block_until_ready(normalization_forward(x1, mean, std, NNz=True))
    ref1 = (x1 - mean[2:]) / std[2:]
    np.testing.assert_allclose(np.asarray(out1), np.asarray(ref1), rtol=1e-6, atol=1e-6)

    # Case 2: NNz=False -> input features = D = 34
    x2 = jax.random.normal(kx, (B, D), dtype=jnp.float32)
    out2 = jax.block_until_ready(normalization_forward(x2, mean, std, NNz=False))
    mean_eff = jnp.concatenate([jnp.zeros((2,), jnp.float32), mean[2:]], axis=0)
    std_eff = jnp.concatenate([jnp.ones((2,), jnp.float32), std[2:]], axis=0)
    ref2 = (x2 - mean_eff) / std_eff
    np.testing.assert_allclose(np.asarray(out2), np.asarray(ref2), rtol=1e-6, atol=1e-6)

    # Case 3: non-multiple-of-8 batch (exercises full-dims single-block path).
    x3 = jax.random.normal(kx2, (13, D - 2), dtype=jnp.float32)
    out3 = jax.block_until_ready(normalization_forward(x3, mean, std, NNz=True))
    ref3 = (x3 - mean[2:]) / std[2:]
    np.testing.assert_allclose(np.asarray(out3), np.asarray(ref3), rtol=1e-6, atol=1e-6)

    # Case 4: 3-D input with leading dims (exercises flatten/reshape path).
    x4 = jax.random.normal(kx3, (2, 5, D - 2), dtype=jnp.float32)
    out4 = jax.block_until_ready(normalization_forward(x4, mean, std, NNz=True))
    ref4 = (x4 - mean[2:]) / std[2:]
    np.testing.assert_allclose(np.asarray(out4), np.asarray(ref4), rtol=1e-6, atol=1e-6)

    print("KERNEL_OK")
</pallas_src>

<mosaic_0001>
module attributes {stable_mosaic.version = 11 : i64} {
  func.func @_normalize_kernel(%arg0: i32, %arg1: memref<8x32xf32, #tpu.memory_space<vmem>>, %arg2: memref<1x32xf32, #tpu.memory_space<vmem>>, %arg3: memref<1x32xf32, #tpu.memory_space<vmem>>, %arg4: memref<8x32xf32, #tpu.memory_space<vmem>>) attributes {dimension_semantics = [#tpu.dimension_semantics<parallel>], iteration_bounds = array<i64: 1>, scalar_prefetch = 0 : i64, scratch_operands = 0 : i64, tpu.core_type = #tpu.core_type<tc>, window_params = [{transform_indices = @transform_0, window_bounds = array<i64: 8, 32>}, {pipeline_mode = #tpu.pipeline_mode<synchronous>, transform_indices = @transform_1, window_bounds = array<i64: 1, 32>}, {pipeline_mode = #tpu.pipeline_mode<synchronous>, transform_indices = @transform_2, window_bounds = array<i64: 1, 32>}, {transform_indices = @transform_3, window_bounds = array<i64: 8, 32>}]} {
    %c0 = arith.constant 0 : index
    %c0_0 = arith.constant 0 : index
    %0 = vector.load %arg1[%c0, %c0_0] : memref<8x32xf32, #tpu.memory_space<vmem>>, vector<8x32xf32>
    %c0_1 = arith.constant 0 : index
    %c0_2 = arith.constant 0 : index
    %1 = vector.load %arg2[%c0_1, %c0_2] : memref<1x32xf32, #tpu.memory_space<vmem>>, vector<1x32xf32>
    %2 = vector.broadcast %1 : vector<1x32xf32> to vector<8x32xf32>
    %3 = arith.subf %0, %2 : vector<8x32xf32>
    %c0_3 = arith.constant 0 : index
    %c0_4 = arith.constant 0 : index
    %4 = vector.load %arg3[%c0_3, %c0_4] : memref<1x32xf32, #tpu.memory_space<vmem>>, vector<1x32xf32>
    %5 = vector.broadcast %4 : vector<1x32xf32> to vector<8x32xf32>
    %6 = arith.mulf %3, %5 : vector<8x32xf32>
    %c0_5 = arith.constant 0 : index
    %c0_6 = arith.constant 0 : index
    %7 = vector.load %arg4[%c0_5, %c0_6] : memref<8x32xf32, #tpu.memory_space<vmem>>, vector<8x32xf32>
    tpu.vector_store %arg4[%c0_5, %c0_6], %6 {strides = array<i32>} : memref<8x32xf32, #tpu.memory_space<vmem>>, vector<8x32xf32>,
    return
  }
  func.func @transform_0(%arg0: i32) -> (i32, i32) {
    %c0_i32 = arith.constant 0 : i32
    %c0_i32_0 = arith.constant 0 : i32
    return %arg0, %c0_i32 : i32, i32
  }
  func.func @transform_1(%arg0: i32) -> (i32, i32) {
    %c0_i32 = arith.constant 0 : i32
    %c0_i32_0 = arith.constant 0 : i32
    %c0_i32_1 = arith.constant 0 : i32
    return %c0_i32, %c0_i32_0 : i32, i32
  }
  func.func @transform_2(%arg0: i32) -> (i32, i32) {
    %c0_i32 = arith.constant 0 : i32
    %c0_i32_0 = arith.constant 0 : i32
    %c0_i32_1 = arith.constant 0 : i32
    return %c0_i32, %c0_i32_0 : i32, i32
  }
  func.func @transform_3(%arg0: i32) -> (i32, i32) {
    %c0_i32 = arith.constant 0 : i32
    %c0_i32_0 = arith.constant 0 : i32
    return %arg0, %c0_i32 : i32, i32
  }
}

</mosaic_0001>

<llo_original>
// kernel: tpu_custom_call.1
$region0: #{tpu_custom_call.1}
  #allocation0 [shape = 'u32[]', space=smem, size = 0x4, offset = 0x4, fixed_abs, tag = 'smem constant byte address 0x4 - core index']
  #allocation1 [shape = 'u32[144,128]{1,0:T(1,128)}', space=vmem, size = 0x12000, scoped, tag = 'internal scratch']
  %s0 = inlined_call_operand.hbm [shape: f32[8,32], index: 0, kind: input, shape index: {}]
  %s1 = inlined_call_operand.vmem [shape: f32[1,32], index: 1, kind: input, shape index: {}]
  %s2 = inlined_call_operand.vmem [shape: f32[1,32], index: 2, kind: input, shape index: {}]
  %s3 = inlined_call_operand.hbm [shape: f32[8,32], index: 3, kind: output, shape index: {}]
  %s4 = sld [smem:[#allocation0]]
  $region26: #{tpu_custom_call.1} parent=0
    _
  %s6 = ssub.s32 1, %s4
  %s7 = scalar_select 0, %s6, %s4
  $region1: #{tpu_custom_call.1} parent=0
    #allocation2 [shape = 'u8[4096]{0}', space=vmem, size = 0x1000, scoped, tag = 'input window, operand 0, single buffered']
    #allocation3 [shape = 's32[1]{0}', space=sflag, size = 0x4, scoped, tag = 'scoped memory for tpu_custom_call.1']
    #allocation4 [shape = 's32[1]{0}', space=sflag, size = 0x4, scoped, tag = 'scoped memory for tpu_custom_call.1']
    #allocation5 [shape = 'u8[4096]{0}', space=vmem, size = 0x1000, scoped, tag = 'output window, operand 0, single buffered']
    %8 = vsyncpa [#allocation3], 0
    %9 = vsyncpa [#allocation4], 0
    // Predicated region
    $region2: #{tpu_custom_call.1} parent=1 // pred_check
      _
    $region3: #{tpu_custom_call.1} parent=1 // pred_check_branch
      %11 = sbr.rel (0) target = $region5
    $region4: #{tpu_custom_call.1} parent=1 // pred_region
      %s13 = ssub.s32 128, 128
      %14 = vsyncadd [#allocation3], %s13
      %s16 = sshll.u32 [#allocation2], 4
      %s17 = int_to_ptr.vmem [resolvable:$true] %s16
      %19 = dma.hbm_to_vmem [thread:$0]  %s0, 128, %s17, [#allocation3]
    $region5: #{tpu_custom_call.1} parent=1 // pred_fallthru
      _
    // Predicated region
    $region6: #{tpu_custom_call.1} parent=1 // pred_check
      _
    $region7: #{tpu_custom_call.1} parent=1 // pred_check_branch
      %21 = sbr.rel (0) target = $region9
    $region8: #{tpu_custom_call.1} parent=1 // pred_region
      _
    $region9: #{tpu_custom_call.1} parent=1 // pred_fallthru
      _
    // Predicated region
    $region10: #{tpu_custom_call.1} parent=1 // pred_check
      _
    $region11: #{tpu_custom_call.1} parent=1 // pred_check_branch
      %23 = sbr.rel (0) target = $region13
    $region12: #{tpu_custom_call.1} parent=1 // pred_region
      _
    $region13: #{tpu_custom_call.1} parent=1 // pred_fallthru
      _
    // Predicated region
    $region14: #{tpu_custom_call.1} parent=1 // pred_check
      _
    $region15: #{tpu_custom_call.1} parent=1 // pred_check_branch
      %25 = sbr.rel (0) target = $region17
    $region16: #{tpu_custom_call.1} parent=1 // pred_region
      %26 = dma.done [#allocation3], 128
    $region17: #{tpu_custom_call.1} parent=1 // pred_fallthru
      _
    %v27 = vld [vmem:[#allocation2] sm:$0xff]
    %v28 = vld [vmem:[%s1] sm:$0x1]
    %v30 = vlaneseq
    %v31 = vshrl.u32 %v30, 7
    %v32 = vsub.s32 0, %v31
    %v33 = vrot.slane %v28, %v32
    %v35 = vsub.f32 %v27, %v33
    %v36 = vld [vmem:[%s2] sm:$0x1]
    %v38 = vlaneseq
    %v39 = vshrl.u32 %v38, 7
    %v40 = vsub.s32 0, %v39
    %v41 = vrot.slane %v36, %v40
    %v43 = vmul.f32 %v35, %v41
    %vm44 = vcmask 261120
    %45 = vst.msk [vmem:[#allocation5] sm:$0xff] %vm44, %v43
    // Predicated region
    $region18: #{tpu_custom_call.1} parent=1 // pred_check
      _
    $region19: #{tpu_custom_call.1} parent=1 // pred_check_branch
      %47 = sbr.rel (0) target = $region21
    $region20: #{tpu_custom_call.1} parent=1 // pred_region
      %s49 = ssub.s32 128, 128
      %50 = vsyncadd [#allocation4], %s49
      %s52 = sshll.u32 [#allocation5], 4
      %s53 = int_to_ptr.vmem [resolvable:$true] %s52
      %55 = dma.vmem_to_hbm [thread:$0]  %s53, 128, %s3, [#allocation4]
    $region21: #{tpu_custom_call.1} parent=1 // pred_fallthru
      _
    // Predicated region
    $region22: #{tpu_custom_call.1} parent=1 // pred_check
      _
    $region23: #{tpu_custom_call.1} parent=1 // pred_check_branch
      %57 = sbr.rel (0) target = $region25
    $region24: #{tpu_custom_call.1} parent=1 // pred_region
      %58 = dma.done [#allocation4], 128
    $region25: #{tpu_custom_call.1} parent=1 // pred_fallthru
      _
    %59 = vsyncpa [#allocation3], 1
    %60 = vsyncpa [#allocation4], 1

</llo_original>
